<compile_context>
chip_gen: v7x
topology: tpu7x:2x2x1
jax: 0.10.0
libtpu: 0.0.40
codegen_flags: <defaults>
</compile_context>

<pallas_src>
import math
import functools

import jax
import jax.numpy as jnp
from jax.experimental import pallas as pl
from jax.experimental.pallas import tpu as pltpu


def _timestep_emb_kernel(t_ref, freqs_ref, phase_ref, out_ref):
    # t_ref:     [TILE_N, 1]           float32 timesteps
    # freqs_ref: [1, num_channels]     float32 (scale folded in, 0 for pad col)
    # phase_ref: [1, num_channels]     float32 (pi/2 on the cos half, else 0)
    # out_ref:   [TILE_N, num_channels]
    t = t_ref[...]                                   # [TILE_N, 1]
    arg = t * freqs_ref[...] + phase_ref[...]        # broadcast -> [TILE_N, C]
    # Single lane-dense full-tile store; cos(x) is computed as sin(x + pi/2).
    out_ref[...] = jnp.sin(arg).astype(out_ref.dtype)


def _round8(v):
    return -(-int(v) // 8) * 8


def temporal_timesteps(timesteps, num_channels, flip_sin_to_cos,
                       downscale_freq_shift, scale=1.0, max_period=10000,
                       tile_n=1024, out_dtype=jnp.float32):
    """JAX/Pallas equivalent of TemporalTimesteps.forward (no parameters)."""
    assert timesteps.ndim == 1, "Timesteps should be a 1d-array"
    n = timesteps.shape[0]
    half_dim = num_channels // 2
    pad_cols = num_channels - 2 * half_dim           # 0 or 1
    assert half_dim > 0, "num_channels must be >= 2"
    assert float(half_dim) != float(downscale_freq_shift), \
        "downscale_freq_shift == half_dim divides by zero"

    # --- static frequency / phase tables, built once outside the kernel -----
    # Identical op sequence / dtypes to the reference so the base freqs are
    # bit-exact; `scale` folded in afterwards.
    exponent = -math.log(max_period) * jnp.arange(half_dim, dtype=jnp.float32)
    exponent = exponent / (half_dim - downscale_freq_shift)
    freqs = jnp.exp(exponent) * jnp.float32(scale)            # [half_dim]

    zero_pad = jnp.zeros((pad_cols,), jnp.float32)
    half_pi = jnp.full((half_dim,), jnp.float32(math.pi / 2.0))
    zeros_h = jnp.zeros((half_dim,), jnp.float32)

    freqs_full = jnp.concatenate([freqs, freqs, zero_pad]).reshape(1, num_channels)
    if flip_sin_to_cos:
        # layout: [cos(t*f), sin(t*f), pad]
        phase_full = jnp.concatenate([half_pi, zeros_h, zero_pad])
    else:
        # layout: [sin(t*f), cos(t*f), pad]
        phase_full = jnp.concatenate([zeros_h, half_pi, zero_pad])
    phase_full = phase_full.reshape(1, num_channels)

    t2d = timesteps.astype(jnp.float32).reshape(n, 1)

    # --- tiling over rows ----------------------------------------------------
    # Clamp tile_n so the grid has >= 2 steps when possible (v7x: two TCs share
    # the "parallel" axis); keep it a multiple of 8 and <= requested tile_n.
    tile_n = max(8, min((int(tile_n) // 8) * 8, _round8(pl.cdiv(n, 2))))
    grid = (pl.cdiv(n, tile_n),)

    # --- VMEM budget (double-buffered blocks + headroom, capped for v7x) -----
    out_bytes = tile_n * num_channels * jnp.dtype(out_dtype).itemsize
    t_bytes = tile_n * 128 * 4                     # (tile_n, 1) block lane-pads to 128
    tbl_bytes = 8 * num_channels * 4               # (1, C) block sublane-pads to 8
    vmem_bytes = 2 * (out_bytes + t_bytes + 2 * tbl_bytes) + (2 << 20)
    vmem_bytes = min(int(vmem_bytes), 64 << 20)

    emb = pl.pallas_call(
        _timestep_emb_kernel,
        out_shape=jax.ShapeDtypeStruct((n, num_channels), out_dtype),
        grid=grid,
        in_specs=[
            pl.BlockSpec((tile_n, 1), lambda i: (i, 0)),
            pl.BlockSpec((1, num_channels), lambda i: (0, 0)),
            pl.BlockSpec((1, num_channels), lambda i: (0, 0)),
        ],
        out_specs=pl.BlockSpec((tile_n, num_channels), lambda i: (i, 0)),
        compiler_params=pltpu.CompilerParams(
            dimension_semantics=("parallel",),
            vmem_limit_bytes=vmem_bytes),
    )(t2d, freqs_full, phase_full)
    return emb


def _reference(timesteps, num_channels, flip_sin_to_cos, downscale_freq_shift,
               scale=1.0, max_period=10000):
    """Faithful JAX transcription of the PyTorch get_timestep_embedding."""
    half_dim = num_channels // 2
    exponent = -math.log(max_period) * jnp.arange(half_dim, dtype=jnp.float32)
    exponent = exponent / (half_dim - downscale_freq_shift)
    freqs = jnp.exp(exponent)
    emb = timesteps.astype(jnp.float32)[:, None] * freqs[None, :]
    emb = scale * emb
    emb = jnp.concatenate([jnp.sin(emb), jnp.cos(emb)], axis=-1)
    if flip_sin_to_cos:
        emb = jnp.concatenate([emb[:, half_dim:], emb[:, :half_dim]], axis=-1)
    if num_channels % 2 == 1:
        emb = jnp.pad(emb, ((0, 0), (0, 1)))
    return emb


if __name__ == "__main__":
    key = jax.random.PRNGKey(0)
    k1, k2 = jax.random.split(key)

    # Case 1: SVD-style — batch of 8 timesteps, 256-dim embedding,
    #         flip_sin_to_cos=True, downscale_freq_shift=0.
    N1, C1, FLIP1, SHIFT1 = 8, 256, True, 0.0
    t1 = jax.random.uniform(k1, (N1,), dtype=jnp.float32) * 100.0
    out1 = jax.block_until_ready(temporal_timesteps(t1, C1, FLIP1, SHIFT1))
    ref1 = _reference(t1, C1, FLIP1, SHIFT1)
    assert out1.shape == (N1, C1)
    assert jnp.allclose(out1, ref1, atol=2e-4, rtol=1e-5), \
        f"case1 max err {jnp.max(jnp.abs(out1 - ref1))}"

    # Case 2: odd embedding dim (zero-padded last channel), non-128-aligned
    #         half_dim, ragged row tile, scale != 1, shift = 1.
    N2, C2, FLIP2, SHIFT2, SCALE2 = 13, 321, False, 1.0, 2.0
    t2 = jax.random.uniform(k2, (N2,), dtype=jnp.float32) * 100.0
    out2 = jax.block_until_ready(
        temporal_timesteps(t2, C2, FLIP2, SHIFT2, scale=SCALE2))
    ref2 = _reference(t2, C2, FLIP2, SHIFT2, scale=SCALE2)
    assert out2.shape == (N2, C2)
    assert jnp.allclose(out2, ref2, atol=2e-4, rtol=1e-5), \
        f"case2 max err {jnp.max(jnp.abs(out2 - ref2))}"

    # Case 3: bf16 output path (writeback-bound usage) — loose tolerance.
    out3 = jax.block_until_ready(
        temporal_timesteps(t1, C1, FLIP1, SHIFT1, out_dtype=jnp.bfloat16))
    assert out3.shape == (N1, C1) and out3.dtype == jnp.bfloat16
    assert jnp.allclose(out3.astype(jnp.float32), ref1, atol=2e-2, rtol=0.0)

    print("KERNEL_OK")
</pallas_src>

<mosaic_0001>
module attributes {stable_mosaic.version = 11 : i64} {
  func.func @_timestep_emb_kernel(%arg0: i32, %arg1: memref<8x1xf32, #tpu.memory_space<vmem>>, %arg2: memref<1x256xf32, #tpu.memory_space<vmem>>, %arg3: memref<1x256xf32, #tpu.memory_space<vmem>>, %arg4: memref<8x256xf32, #tpu.memory_space<vmem>>) attributes {dimension_semantics = [#tpu.dimension_semantics<parallel>], iteration_bounds = array<i64: 1>, scalar_prefetch = 0 : i64, scratch_operands = 0 : i64, tpu.core_type = #tpu.core_type<tc>, window_params = [{transform_indices = @transform_0, window_bounds = array<i64: 8, 1>}, {pipeline_mode = #tpu.pipeline_mode<synchronous>, transform_indices = @transform_1, window_bounds = array<i64: 1, 256>}, {pipeline_mode = #tpu.pipeline_mode<synchronous>, transform_indices = @transform_2, window_bounds = array<i64: 1, 256>}, {transform_indices = @transform_3, window_bounds = array<i64: 8, 256>}]} {
    %c0 = arith.constant 0 : index
    %c0_0 = arith.constant 0 : index
    %0 = vector.load %arg1[%c0, %c0_0] : memref<8x1xf32, #tpu.memory_space<vmem>>, vector<8x1xf32>
    %c0_1 = arith.constant 0 : index
    %c0_2 = arith.constant 0 : index
    %1 = vector.load %arg2[%c0_1, %c0_2] : memref<1x256xf32, #tpu.memory_space<vmem>>, vector<1x256xf32>
    %2 = vector.broadcast %0 : vector<8x1xf32> to vector<8x256xf32>
    %3 = vector.broadcast %1 : vector<1x256xf32> to vector<8x256xf32>
    %4 = arith.mulf %2, %3 : vector<8x256xf32>
    %c0_3 = arith.constant 0 : index
    %c0_4 = arith.constant 0 : index
    %5 = vector.load %arg3[%c0_3, %c0_4] : memref<1x256xf32, #tpu.memory_space<vmem>>, vector<1x256xf32>
    %6 = vector.broadcast %5 : vector<1x256xf32> to vector<8x256xf32>
    %7 = arith.addf %4, %6 : vector<8x256xf32>
    %8 = math.sin %7 : vector<8x256xf32>
    %c0_5 = arith.constant 0 : index
    %c0_6 = arith.constant 0 : index
    %9 = vector.load %arg4[%c0_5, %c0_6] : memref<8x256xf32, #tpu.memory_space<vmem>>, vector<8x256xf32>
    tpu.vector_store %arg4[%c0_5, %c0_6], %8 {strides = array<i32>} : memref<8x256xf32, #tpu.memory_space<vmem>>, vector<8x256xf32>,
    return
  }
  func.func @transform_0(%arg0: i32) -> (i32, i32) {
    %c0_i32 = arith.constant 0 : i32
    %c0_i32_0 = arith.constant 0 : i32
    return %arg0, %c0_i32 : i32, i32
  }
  func.func @transform_1(%arg0: i32) -> (i32, i32) {
    %c0_i32 = arith.constant 0 : i32
    %c0_i32_0 = arith.constant 0 : i32
    %c0_i32_1 = arith.constant 0 : i32
    return %c0_i32, %c0_i32_0 : i32, i32
  }
  func.func @transform_2(%arg0: i32) -> (i32, i32) {
    %c0_i32 = arith.constant 0 : i32
    %c0_i32_0 = arith.constant 0 : i32
    %c0_i32_1 = arith.constant 0 : i32
    return %c0_i32, %c0_i32_0 : i32, i32
  }
  func.func @transform_3(%arg0: i32) -> (i32, i32) {
    %c0_i32 = arith.constant 0 : i32
    %c0_i32_0 = arith.constant 0 : i32
    return %arg0, %c0_i32 : i32, i32
  }
}

</mosaic_0001>

<llo_original>
// kernel: tpu_custom_call.1
$region0: #{tpu_custom_call.1}
  #allocation0 [shape = 'u32[]', space=smem, size = 0x4, offset = 0x4, fixed_abs, tag = 'smem constant byte address 0x4 - core index']
  #allocation1 [shape = 'u32[144,128]{1,0:T(1,128)}', space=vmem, size = 0x12000, scoped, tag = 'internal scratch']
  %s0 = inlined_call_operand.vmem [shape: f32[8,1], index: 0, kind: input, shape index: {}]
  %s1 = inlined_call_operand.vmem [shape: f32[1,256], index: 1, kind: input, shape index: {}]
  %s2 = inlined_call_operand.vmem [shape: f32[1,256], index: 2, kind: input, shape index: {}]
  %s3 = inlined_call_operand.hbm [shape: f32[8,256], index: 3, kind: output, shape index: {}]
  %s4 = sld [smem:[#allocation0]]
  $region22: #{tpu_custom_call.1} parent=0
    _
  %s6 = ssub.s32 1, %s4
  %s7 = scalar_select 0, %s6, %s4
  $region1: #{tpu_custom_call.1} parent=0
    #allocation2 [shape = 'u8[8192]{0}', space=vmem, size = 0x2000, scoped, tag = 'output window, operand 0, single buffered']
    #allocation3 [shape = 's32[1]{0}', space=sflag, size = 0x4, scoped, tag = 'scoped memory for tpu_custom_call.1']
    %8 = vsyncpa [#allocation3], 0
    // Predicated region
    $region2: #{tpu_custom_call.1} parent=1 // pred_check
      _
    $region3: #{tpu_custom_call.1} parent=1 // pred_check_branch
      %10 = sbr.rel (0) target = $region5
    $region4: #{tpu_custom_call.1} parent=1 // pred_region
      _
    $region5: #{tpu_custom_call.1} parent=1 // pred_fallthru
      _
    // Predicated region
    $region6: #{tpu_custom_call.1} parent=1 // pred_check
      _
    $region7: #{tpu_custom_call.1} parent=1 // pred_check_branch
      %12 = sbr.rel (0) target = $region9
    $region8: #{tpu_custom_call.1} parent=1 // pred_region
      _
    $region9: #{tpu_custom_call.1} parent=1 // pred_fallthru
      _
    // Predicated region
    $region10: #{tpu_custom_call.1} parent=1 // pred_check
      _
    $region11: #{tpu_custom_call.1} parent=1 // pred_check_branch
      %14 = sbr.rel (0) target = $region13
    $region12: #{tpu_custom_call.1} parent=1 // pred_region
      _
    $region13: #{tpu_custom_call.1} parent=1 // pred_fallthru
      _
    %v15 = vld [vmem:[%s0] sm:$0xff]
    %v16 = vld [vmem:[%s1] sm:$0x3]
    %18 = vset.pattern.permute.xlu0 0
    %19 = vperm.xlu0 %18, %v15
    %v20 = vpop.permute.xlu0 %19
    %v23 = vlaneseq
    %v24 = vshrl.u32 %v23, 7
    %v25 = vsub.s32 0, %v24
    %v26 = vrot.slane %v16, %v25
    %v27 = vlaneseq
    %v28 = vshrl.u32 %v27, 7
    %v29 = vsub.s32 1, %v28
    %v30 = vrot.slane %v16, %v29
    %v33 = vmul.f32 %v20, %v26
    %v34 = vmul.f32 %v20, %v30
    %v35 = vld [vmem:[%s2] sm:$0x3]
    %v37 = vlaneseq
    %v38 = vshrl.u32 %v37, 7
    %v39 = vsub.s32 0, %v38
    %v40 = vrot.slane %v35, %v39
    %v41 = vlaneseq
    %v42 = vshrl.u32 %v41, 7
    %v43 = vsub.s32 1, %v42
    %v44 = vrot.slane %v35, %v43
    %v47 = vadd.f32 %v33, %v40
    %v48 = vadd.f32 %v34, %v44
    %v49 = vand.u32 2147483647, %v47
    %vm50 = vcmp.le.f32.partialorder %v49, 0.7853982
    %vm51 = vcmp.lt.s32.totalorder %v47, 0
    %v52 = vand.u32 %v47, 2139095040
    %v53 = vshrl.u32 %v52, 23
    %v54 = vsub.s32 %v53, 127
    %v55 = vand.u32 2147483647, %v47
    %v56 = vand.u32 %v55, 8388607
    %v57 = vor.u32 %v56, 8388608
    %v58 = vsub.s32 0, %v57
    %v59 = vadd.s32 %v54, 1
    %vm60 = vcmp.gt.s32.totalorder %v59, 0
    %v61 = vsel %vm60, %v59, 0
    %v62 = vshrl.u32 %v61, 5
    %v63 = vand.u32 %v61, 31
    %v64 = vsub.s32 32, %v63
    %v65 = vshrl.u32 683565275, %v64
    %v66 = vshll.u32 683565275, %v63
    %v67 = vshrl.u32 2475754826, %v64
    %v68 = vor.u32 %v66, %v67
    %v69 = vshll.u32 2475754826, %v63
    %v70 = vshrl.u32 2131351028, %v64
    %v71 = vor.u32 %v69, %v70
    %v72 = vshll.u32 2131351028, %v63
    %v73 = vshrl.u32 2102212464, %v64
    %v74 = vor.u32 %v72, %v73
    %v75 = vshll.u32 2102212464, %v63
    %v76 = vshrl.u32 920167782, %v64
    %v77 = vor.u32 %v75, %v76
    %v78 = vshll.u32 920167782, %v63
    %v79 = vshrl.u32 1326507024, %v64
    %v80 = vor.u32 %v78, %v79
    %vm81 = vcmp.lt.s32.totalorder %v62, 1
    %vm82 = vcmp.lt.s32.totalorder %v62, 2
    %vm83 = vcmp.lt.s32.totalorder %v62, 3
    %vm84 = vcmp.lt.s32.totalorder %v62, 4
    %v85 = vsel %vm81, %v65, %v68
    %v86 = vsel %vm84, %v74, 2102212464
    %v87 = vsel %vm83, %v71, %v86
    %v88 = vsel %vm82, %v85, %v87
    %v89 = vsel %vm81, %v68, %v71
    %v90 = vsel %vm84, %v77, 920167782
    %v91 = vsel %vm83, %v74, %v90
    %v92 = vsel %vm82, %v89, %v91
    %v93 = vsel %vm81, %v71, %v74
    %v94 = vsel %vm84, %v80, 1326507024
    %v95 = vsel %vm83, %v77, %v94
    %v96 = vsel %vm82, %v93, %v95
    %v97 = vshll.u32 %v57, 8
    %v98 = vmul.u32.u64.compose %v97, %v96
    %v99 = vextract.low.u32 %v98
    %v100 = vextract.high.u32 %v98
    %v101 = vmul.u32.u64.compose %v97, %v92
    %v102 = vextract.low.u32 %v101
    %v103 = vextract.high.u32 %v101
    %v104 = vmul.u32 %v97, %v88
    %v105 = vadd.s32 %v100, %v102
    %vm106 = vc.u32 %v100, %v102
    %v107 = vadd.s32 %v103, 1
    %v108 = vsel %vm106, %v107, %v103
    %v109 = vadd.s32 %v104, %v108
    %v110 = vadd.s32 %v109, 536870912
    %v111 = vshrl.u32 %v110, 30
    %v112 = vshll.u32 %v111, 30
    %v113 = vsub.s32 %v109, %v112
    %vm114 = vcmp.lt.s32.totalorder %v113, 0
    %v115 = vsub.s32 0, %v113
    %v116 = vsel %vm114, %v115, %v113
    %v117 = vclz %v116
    %v118 = vsub.s32 %v117, 2
    %vm119 = vcmp.gt.s32.totalorder 0, %v118
    %v120 = vsel %vm119, 0, %v118
    %v121 = vsub.s32 32, %v120
    %v122 = vshll.u32 %v113, %v120
    %v123 = vshrl.u32 %v105, %v121
    %v124 = vor.u32 %v122, %v123
    %v125 = vsub.s32 4294967266, %v120
    %v126 = vadd.s32 %v125, 127
    %v127 = vshll.u32 %v126, 23
    %v128 = vor.u32 4788187, %v127
    %v129 = vand.u32 2147483647, %v128
    %v131 = vcvt.s32.f32 %v124
    %v132 = vmul.f32 %v131, %v129
    %v133 = vxor.u32 %v132, 2147483648
    %v134 = vsel %vm51, %v133, %v132
    %v135 = vsub.s32 4, %v111
    %v136 = vsel %vm51, %v135, %v111
    %v137 = vsel %vm50, %v47, %v134
    %v138 = vsel %vm50, 0, %v136
    %v139 = vcosq.f32.pop %v137
    %v140 = vsinq.f32.pop %v137
    %vm141 = vweird.f32 %v47
    %v142 = vadd.s32 %v138, 3
    %v143 = vand.u32 %v142, 3
    %vm144 = vcmp.lt.s32.totalorder %v143, 2
    %vm145 = vcmp.eq.s32.totalorder %v143, 0
    %v146 = vxor.u32 %v140, 2147483648
    %v147 = vsel %vm145, %v139, %v146
    %vm148 = vcmp.eq.s32.totalorder %v143, 2
    %v149 = vxor.u32 %v139, 2147483648
    %v150 = vsel %vm148, %v149, %v140
    %v151 = vsel %vm144, %v147, %v150
    %v152 = vsel %vm141, nan, %v151
    %v153 = vand.u32 2147483647, %v48
    %vm154 = vcmp.le.f32.partialorder %v153, 0.7853982
    %vm155 = vcmp.lt.s32.totalorder %v48, 0
    %v156 = vand.u32 %v48, 2139095040
    %v157 = vshrl.u32 %v156, 23
    %v158 = vsub.s32 %v157, 127
    %v159 = vand.u32 2147483647, %v48
    %v160 = vand.u32 %v159, 8388607
    %v161 = vor.u32 %v160, 8388608
    %v162 = vsub.s32 0, %v161
    %v163 = vadd.s32 %v158, 1
    %vm164 = vcmp.gt.s32.totalorder %v163, 0
    %v165 = vsel %vm164, %v163, 0
    %v166 = vshrl.u32 %v165, 5
    %v167 = vand.u32 %v165, 31
    %v168 = vsub.s32 32, %v167
    %v169 = vshrl.u32 683565275, %v168
    %v170 = vshll.u32 683565275, %v167
    %v171 = vshrl.u32 2475754826, %v168
    %v172 = vor.u32 %v170, %v171
    %v173 = vshll.u32 2475754826, %v167
    %v174 = vshrl.u32 2131351028, %v168
    %v175 = vor.u32 %v173, %v174
    %v176 = vshll.u32 2131351028, %v167
    %v177 = vshrl.u32 2102212464, %v168
    %v178 = vor.u32 %v176, %v177
    %v179 = vshll.u32 2102212464, %v167
    %v180 = vshrl.u32 920167782, %v168
    %v181 = vor.u32 %v179, %v180
    %v182 = vshll.u32 920167782, %v167
    %v183 = vshrl.u32 1326507024, %v168
    %v184 = vor.u32 %v182, %v183
    %vm185 = vcmp.lt.s32.totalorder %v166, 1
    %vm186 = vcmp.lt.s32.totalorder %v166, 2
    %vm187 = vcmp.lt.s32.totalorder %v166, 3
    %vm188 = vcmp.lt.s32.totalorder %v166, 4
    %v189 = vsel %vm185, %v169, %v172
    %v190 = vsel %vm188, %v178, 2102212464
    %v191 = vsel %vm187, %v175, %v190
    %v192 = vsel %vm186, %v189, %v191
    %v193 = vsel %vm185, %v172, %v175
    %v194 = vsel %vm188, %v181, 920167782
    %v195 = vsel %vm187, %v178, %v194
    %v196 = vsel %vm186, %v193, %v195
    %v197 = vsel %vm185, %v175, %v178
    %v198 = vsel %vm188, %v184, 1326507024
    %v199 = vsel %vm187, %v181, %v198
    %v200 = vsel %vm186, %v197, %v199
    %v201 = vshll.u32 %v161, 8
    %v202 = vmul.u32.u64.compose %v201, %v200
    %v203 = vextract.low.u32 %v202
    %v204 = vextract.high.u32 %v202
    %v205 = vmul.u32.u64.compose %v201, %v196
    %v206 = vextract.low.u32 %v205
    %v207 = vextract.high.u32 %v205
    %v208 = vmul.u32 %v201, %v192
    %v209 = vadd.s32 %v204, %v206
    %vm210 = vc.u32 %v204, %v206
    %v211 = vadd.s32 %v207, 1
    %v212 = vsel %vm210, %v211, %v207
    %v213 = vadd.s32 %v208, %v212
    %v214 = vadd.s32 %v213, 536870912
    %v215 = vshrl.u32 %v214, 30
    %v216 = vshll.u32 %v215, 30
    %v217 = vsub.s32 %v213, %v216
    %vm218 = vcmp.lt.s32.totalorder %v217, 0
    %v219 = vsub.s32 0, %v217
    %v220 = vsel %vm218, %v219, %v217
    %v221 = vclz %v220
    %v222 = vsub.s32 %v221, 2
    %vm223 = vcmp.gt.s32.totalorder 0, %v222
    %v224 = vsel %vm223, 0, %v222
    %v225 = vsub.s32 32, %v224
    %v226 = vshll.u32 %v217, %v224
    %v227 = vshrl.u32 %v209, %v225
    %v228 = vor.u32 %v226, %v227
    %v229 = vsub.s32 4294967266, %v224
    %v230 = vadd.s32 %v229, 127
    %v231 = vshll.u32 %v230, 23
    %v232 = vor.u32 4788187, %v231
    %v233 = vand.u32 2147483647, %v232
    %v235 = vcvt.s32.f32 %v228
    %v236 = vmul.f32 %v235, %v233
    %v237 = vxor.u32 %v236, 2147483648
    %v238 = vsel %vm155, %v237, %v236
    %v239 = vsub.s32 4, %v215
    %v240 = vsel %vm155, %v239, %v215
    %v241 = vsel %vm154, %v48, %v238
    %v242 = vsel %vm154, 0, %v240
    %v243 = vcosq.f32.pop %v241
    %v244 = vsinq.f32.pop %v241
    %vm245 = vweird.f32 %v48
    %v246 = vadd.s32 %v242, 3
    %v247 = vand.u32 %v246, 3
    %vm248 = vcmp.lt.s32.totalorder %v247, 2
    %vm249 = vcmp.eq.s32.totalorder %v247, 0
    %v250 = vxor.u32 %v244, 2147483648
    %v251 = vsel %vm249, %v243, %v250
    %vm252 = vcmp.eq.s32.totalorder %v247, 2
    %v253 = vxor.u32 %v243, 2147483648
    %v254 = vsel %vm252, %v253, %v244
    %v255 = vsel %vm248, %v251, %v254
    %v256 = vsel %vm245, nan, %v255
    %257 = vst [vmem:[#allocation2] sm:$0xff] %v152
    %258 = vst [vmem:[#allocation2 + $0x8] sm:$0xff] %v256
    // Predicated region
    $region14: #{tpu_custom_call.1} parent=1 // pred_check
      _
    $region15: #{tpu_custom_call.1} parent=1 // pred_check_branch
      %260 = sbr.rel (0) target = $region17
    $region16: #{tpu_custom_call.1} parent=1 // pred_region
      %s262 = ssub.s32 256, 256
      %263 = vsyncadd [#allocation3], %s262
      %s265 = sshll.u32 [#allocation2], 4
      %s266 = int_to_ptr.vmem [resolvable:$true] %s265
      %268 = dma.vmem_to_hbm [thread:$0]  %s266, 256, %s3, [#allocation3]
    $region17: #{tpu_custom_call.1} parent=1 // pred_fallthru
      _
    // Predicated region
    $region18: #{tpu_custom_call.1} parent=1 // pred_check
      _
    $region19: #{tpu_custom_call.1} parent=1 // pred_check_branch
      %270 = sbr.rel (0) target = $region21
    $region20: #{tpu_custom_call.1} parent=1 // pred_region
      %271 = dma.done [#allocation3], 256
    $region21: #{tpu_custom_call.1} parent=1 // pred_fallthru
      _
    %272 = vsyncpa [#allocation3], 1

</llo_original>
